<compile_context>
chip_gen: v6e
topology: v6e:2x2x1
jax: 0.10.0
libtpu: 0.0.40
codegen_flags: <defaults>
</compile_context>

<pallas_src>
import functools

import jax
import jax.numpy as jnp
from jax.experimental import pallas as pl
from jax.experimental.pallas import tpu as pltpu

_COLS = 1024                            # lane-dense width (multiple of 128 -> unmasked vst)
_TARGET_BLOCK_BYTES = 4 * 1024 * 1024   # ~4 MiB per block (85-86% HBM roofline point)
_MIN_PALLAS_BYTES = 256 * 1024          # below this, plain XLA wins (dispatch overhead)


def _scaler_kernel(x_ref, o_ref, *, rate):
    # Elementwise true-divide by the compile-time rate (matches PyTorch's
    # `inp / self.rate` exactly; the op is HBM-bound so divide vs mul is free).
    o_ref[...] = x_ref[...] / rate


def _round_up(n, m):
    return ((n + m - 1) // m) * m


def _scaler_pallas_2d(x2d, rate, block_rows):
    rows, cols = x2d.shape
    grid = pl.cdiv(rows, block_rows)
    return pl.pallas_call(
        functools.partial(_scaler_kernel, rate=rate),
        out_shape=jax.ShapeDtypeStruct((rows, cols), x2d.dtype),
        grid=(grid,),
        in_specs=[pl.BlockSpec((block_rows, cols), lambda i: (i, 0))],
        out_specs=pl.BlockSpec((block_rows, cols), lambda i: (i, 0)),
        compiler_params=pltpu.CompilerParams(
            dimension_semantics=("parallel",),
            vmem_limit_bytes=32 << 20,
        ),
    )(x2d)


def scaler_forward(x, rate, *, training=True, force_pallas=False):
    """Pallas equivalent of Scaler.forward: out = x / rate.

    `training` kept for API clarity; the reference module's `self.train` is a
    bound method (truthy), so the divide branch is always taken.
    """
    if not training:
        return x  # unreachable for the reference semantics

    rate = float(rate)
    total = x.size
    itemsize = jnp.dtype(x.dtype).itemsize

    # Tiny inputs: one fused XLA elementwise op beats kernel dispatch + plumbing.
    if total * itemsize < _MIN_PALLAS_BYTES and not force_pallas:
        return x / rate

    rows = total // _COLS
    tail = total - rows * _COLS
    if rows == 0:
        return x / rate  # fewer than 1024 elements

    # Dtype-aware block size: ~4 MiB per block.
    target_rows = max(8, _TARGET_BLOCK_BYTES // (_COLS * itemsize))
    if rows <= target_rows:
        if rows >= 16:
            # >=2 blocks so both v7x TensorCores can take part of the grid.
            block_rows = min(_round_up(pl.cdiv(rows, 2), 8), rows)
        else:
            block_rows = rows          # full-dim block (legal even if not %8)
    else:
        block_rows = target_rows       # ragged last block is masked by Pallas

    x_flat = x.reshape(-1)
    main2d = x_flat[: rows * _COLS].reshape(rows, _COLS)  # no-op slice if tail == 0
    out_main = _scaler_pallas_2d(main2d, rate, block_rows).reshape(-1)

    if tail:
        # Sub-1024-element remainder handled in plain JAX (far cheaper than
        # padding the whole tensor and slicing it back off).
        out_flat = jnp.concatenate([out_main, x_flat[rows * _COLS:] / rate])
    else:
        out_flat = out_main
    return out_flat.reshape(x.shape)


if __name__ == "__main__":
    k1, k2 = jax.random.split(jax.random.PRNGKey(0))
    rate = 0.5  # deterministic module "parameter"

    # Small NCHW feature map (the conv-net use case). force_pallas so the
    # kernel path is exercised even below the tiny-input fast-path threshold.
    x = jax.random.normal(k1, (2, 4, 16, 16), dtype=jnp.float32)
    out = jax.block_until_ready(scaler_forward(x, rate, force_pallas=True))
    ref = x / rate
    assert out.shape == x.shape and out.dtype == x.dtype
    assert jnp.allclose(out, ref, rtol=1e-6, atol=1e-6)

    # Shape whose flattened row count (18) is not a multiple of the row block:
    # exercises the 2-block grid with a ragged (masked) last block.
    x2 = jax.random.normal(k2, (1, 8, 48, 48), dtype=jnp.float32)
    out2 = jax.block_until_ready(scaler_forward(x2, rate, force_pallas=True))
    assert jnp.allclose(out2, x2 / rate, rtol=1e-6, atol=1e-6)

    print("KERNEL_OK")
</pallas_src>

<mosaic_0001>
module attributes {stable_mosaic.version = 11 : i64} {
  func.func @_scaler_kernel(%arg0: i32, %arg1: memref<2x1024xf32, #tpu.memory_space<vmem>>, %arg2: memref<2x1024xf32, #tpu.memory_space<vmem>>) attributes {dimension_semantics = [#tpu.dimension_semantics<parallel>], iteration_bounds = array<i64: 1>, scalar_prefetch = 0 : i64, scratch_operands = 0 : i64, tpu.core_type = #tpu.core_type<tc>, window_params = [{transform_indices = @transform_0, window_bounds = array<i64: 2, 1024>}, {transform_indices = @transform_1, window_bounds = array<i64: 2, 1024>}]} {
    %c0 = arith.constant 0 : index
    %c0_0 = arith.constant 0 : index
    %0 = vector.load %arg1[%c0, %c0_0] : memref<2x1024xf32, #tpu.memory_space<vmem>>, vector<2x1024xf32>
    %cst = arith.constant 5.000000e-01 : f32
    %1 = vector.broadcast %cst : f32 to vector<2x1024xf32>
    %2 = arith.divf %0, %1 : vector<2x1024xf32>
    %c0_1 = arith.constant 0 : index
    %c0_2 = arith.constant 0 : index
    %3 = vector.load %arg2[%c0_1, %c0_2] : memref<2x1024xf32, #tpu.memory_space<vmem>>, vector<2x1024xf32>
    tpu.vector_store %arg2[%c0_1, %c0_2], %2 {strides = array<i32>} : memref<2x1024xf32, #tpu.memory_space<vmem>>, vector<2x1024xf32>,
    return
  }
  func.func @transform_0(%arg0: i32) -> (i32, i32) {
    %c0_i32 = arith.constant 0 : i32
    %c0_i32_0 = arith.constant 0 : i32
    return %arg0, %c0_i32 : i32, i32
  }
  func.func @transform_1(%arg0: i32) -> (i32, i32) {
    %c0_i32 = arith.constant 0 : i32
    %c0_i32_0 = arith.constant 0 : i32
    return %arg0, %c0_i32 : i32, i32
  }
}

</mosaic_0001>

<llo_original>
// kernel: tpu_custom_call.1
$region0: #{tpu_custom_call.1}
  #allocation0 [shape = 'u32[]', space=smem, size = 0x4, offset = 0x4, fixed_abs, tag = 'smem constant byte address 0x4 - core index']
  #allocation1 [shape = 'u32[144,128]{1,0:T(1,128)}', space=vmem, size = 0x12000, scoped, tag = 'internal scratch']
  %s0 = inlined_call_operand.hbm [shape: f32[2,1024], index: 0, kind: input, shape index: {}]
  %s1 = inlined_call_operand.hbm [shape: f32[2,1024], index: 1, kind: output, shape index: {}]
  %s2 = sld [smem:[#allocation0]]
  $region18: #{tpu_custom_call.1} parent=0
    _
  %s4 = ssub.s32 1, %s2
  %s5 = scalar_select 0, %s4, %s2
  $region1: #{tpu_custom_call.1} parent=0
    #allocation2 [shape = 'u8[8192]{0}', space=vmem, size = 0x2000, scoped, tag = 'input window, operand 0, single buffered']
    #allocation3 [shape = 's32[1]{0}', space=sflag, size = 0x4, scoped, tag = 'scoped memory for tpu_custom_call.1']
    #allocation4 [shape = 's32[1]{0}', space=sflag, size = 0x4, scoped, tag = 'scoped memory for tpu_custom_call.1']
    #allocation5 [shape = 'u8[8192]{0}', space=vmem, size = 0x2000, scoped, tag = 'output window, operand 0, single buffered']
    %6 = vsyncpa [#allocation3], 0
    %7 = vsyncpa [#allocation4], 0
    // Predicated region
    $region2: #{tpu_custom_call.1} parent=1 // pred_check
      _
    $region3: #{tpu_custom_call.1} parent=1 // pred_check_branch
      %9 = sbr.rel (0) target = $region5
    $region4: #{tpu_custom_call.1} parent=1 // pred_region
      %s11 = ssub.s32 256, 256
      %12 = vsyncadd [#allocation3], %s11
      %s14 = sshll.u32 [#allocation2], 4
      %s15 = int_to_ptr.vmem [resolvable:$true] %s14
      %17 = dma.hbm_to_vmem [thread:$0]  %s0, 256, %s15, [#allocation3]
    $region5: #{tpu_custom_call.1} parent=1 // pred_fallthru
      _
    // Predicated region
    $region6: #{tpu_custom_call.1} parent=1 // pred_check
      _
    $region7: #{tpu_custom_call.1} parent=1 // pred_check_branch
      %19 = sbr.rel (0) target = $region9
    $region8: #{tpu_custom_call.1} parent=1 // pred_region
      %20 = dma.done [#allocation3], 256
    $region9: #{tpu_custom_call.1} parent=1 // pred_fallthru
      _
    %v21 = vld [vmem:[#allocation2] sm:$0xff]
    %v22 = vld [vmem:[#allocation2 + $0x8] sm:$0xff]
    %v23 = vrcp.pop 0.5
    %v24 = vmul.f32 %v21, %v23
    %v25 = vmul.f32 %v22, %v23
    %26 = vst [vmem:[#allocation5] sm:$0xff] %v24
    %27 = vst [vmem:[#allocation5 + $0x8] sm:$0xff] %v25
    // Predicated region
    $region10: #{tpu_custom_call.1} parent=1 // pred_check
      _
    $region11: #{tpu_custom_call.1} parent=1 // pred_check_branch
      %29 = sbr.rel (0) target = $region13
    $region12: #{tpu_custom_call.1} parent=1 // pred_region
      %s31 = ssub.s32 256, 256
      %32 = vsyncadd [#allocation4], %s31
      %s34 = sshll.u32 [#allocation5], 4
      %s35 = int_to_ptr.vmem [resolvable:$true] %s34
      %37 = dma.vmem_to_hbm [thread:$0]  %s35, 256, %s1, [#allocation4]
    $region13: #{tpu_custom_call.1} parent=1 // pred_fallthru
      _
    // Predicated region
    $region14: #{tpu_custom_call.1} parent=1 // pred_check
      _
    $region15: #{tpu_custom_call.1} parent=1 // pred_check_branch
      %39 = sbr.rel (0) target = $region17
    $region16: #{tpu_custom_call.1} parent=1 // pred_region
      %40 = dma.done [#allocation4], 256
    $region17: #{tpu_custom_call.1} parent=1 // pred_fallthru
      _
    %41 = vsyncpa [#allocation3], 1
    %42 = vsyncpa [#allocation4], 1

</llo_original>
